<compile_context>
chip_gen: v6e
topology: v6e:2x2x1
jax: 0.10.0
libtpu: 0.0.40
codegen_flags: <defaults>
</compile_context>

<pallas_src>
import functools

import jax
import jax.numpy as jnp
from jax.experimental import pallas as pl
from jax.experimental.pallas import tpu as pltpu


def _mlp_kernel(x_ref, w1_ref, b1_ref, w2_ref, b2_ref, o_ref):
    # hidden = relu(x @ W1 + b1); accumulate in f32 on the MXU.
    h = jnp.dot(x_ref[...], w1_ref[...], preferred_element_type=jnp.float32)
    h = jnp.maximum(h + b1_ref[...], 0.0)            # (TB, HP) + (1, HP) broadcast
    # out = h @ W2 + b2. O (=1 for Boston) stays unpadded: MXU slack is enormous and
    # the skinny matmul costs nothing, while the writeback stays 4 B/row.
    out = jnp.dot(h.astype(w2_ref.dtype), w2_ref[...],
                  preferred_element_type=jnp.float32)
    o_ref[...] = (out + b2_ref[...]).astype(o_ref.dtype)


def _round_up(x, m):
    return (x + m - 1) // m * m


def prepare_params(w1, b1, w2, b2, mxu_dtype=jnp.bfloat16):
    """Pad/cast the weights once, outside the per-call forward path.

    w1 : (F, H), b1 : (1, H), w2 : (H, O), b2 : (1, O)  (PyTorch weights transposed).
    Only the hidden dim H is padded (to 128); F and O stay unpadded.
    """
    F, H = w1.shape
    O = w2.shape[1]
    HP = _round_up(H, 128)
    w1_p = jnp.zeros((F, HP), mxu_dtype).at[:, :H].set(w1.astype(mxu_dtype))
    b1_p = jnp.zeros((1, HP), jnp.float32).at[:, :H].set(b1.astype(jnp.float32))
    w2_p = jnp.zeros((HP, O), mxu_dtype).at[:H, :].set(w2.astype(mxu_dtype))
    b2_p = b2.astype(jnp.float32).reshape(1, O)
    return w1_p, b1_p, w2_p, b2_p


@functools.partial(jax.jit, static_argnames=("block_b",))
def net_forward(x, w1_p, b1_p, w2_p, b2_p, *, block_b=1024):
    """Fused forward pass: relu(x @ W1 + b1) @ W2 + b2.

    x: (B, F) float32. Params come from prepare_params(). Returns (B, O) float32.
    """
    B, F = x.shape
    HP = w1_p.shape[1]
    O = w2_p.shape[1]
    in_dtype = w1_p.dtype

    # Batch tile: bf16 packs 16 rows per (sublane, lane) tile, f32 packs 8.
    row_align = 16 if in_dtype == jnp.bfloat16 else 8
    TB = block_b if B >= block_b else B
    TB = _round_up(TB, row_align)
    BP = _round_up(B, TB)

    x_p = x.astype(in_dtype)
    if BP != B:
        # Zero rows for the remainder tile (sliced off below). Choosing B a multiple of
        # block_b (or B <= block_b) skips this extra pass entirely.
        x_p = jnp.zeros((BP, F), in_dtype).at[:B, :].set(x_p)

    out_p = pl.pallas_call(
        _mlp_kernel,
        out_shape=jax.ShapeDtypeStruct((BP, O), jnp.float32),
        grid=(BP // TB,),
        in_specs=[
            pl.BlockSpec((TB, F), lambda i: (i, 0)),   # x tile streams over batch
            pl.BlockSpec((F, HP), lambda i: (0, 0)),   # W1 resident in VMEM
            pl.BlockSpec((1, HP), lambda i: (0, 0)),   # b1 resident
            pl.BlockSpec((HP, O), lambda i: (0, 0)),   # W2 resident
            pl.BlockSpec((1, O), lambda i: (0, 0)),    # b2 resident
        ],
        out_specs=pl.BlockSpec((TB, O), lambda i: (i, 0)),
        compiler_params=pltpu.CompilerParams(
            dimension_semantics=("parallel",),          # independent batch tiles (v7x 2xTC)
        ),
    )(x_p, w1_p, b1_p, w2_p, b2_p)

    return out_p[:B] if BP != B else out_p


def init_params(key, n_feature, n_output, hidden=100):
    """Deterministic init mimicking PyTorch Linear default (uniform +/- 1/sqrt(fan_in))."""
    k1, k2, k3, k4 = jax.random.split(key, 4)
    bound1 = 1.0 / jnp.sqrt(jnp.float32(n_feature))
    bound2 = 1.0 / jnp.sqrt(jnp.float32(hidden))
    w1 = jax.random.uniform(k1, (n_feature, hidden), jnp.float32, -bound1, bound1)
    b1 = jax.random.uniform(k2, (1, hidden), jnp.float32, -bound1, bound1)
    w2 = jax.random.uniform(k3, (hidden, n_output), jnp.float32, -bound2, bound2)
    b2 = jax.random.uniform(k4, (1, n_output), jnp.float32, -bound2, bound2)
    return w1, b1, w2, b2


if __name__ == "__main__":
    # Boston housing: 13 features, 1 regression target. Small batch for the demo;
    # block_b=16 gives 2 grid steps (exercises the tiled path, bf16 16-row aligned).
    B, F, O = 32, 13, 1
    key = jax.random.PRNGKey(0)
    kx, kp = jax.random.split(key)

    x = jax.random.normal(kx, (B, F), jnp.float32)
    w1, b1, w2, b2 = init_params(kp, F, O)

    # Pure-JAX reference of the same math.
    ref = jnp.maximum(x @ w1 + b1, 0.0) @ w2 + b2

    # Default bf16 streaming path (f32 accumulation, f32 bias/ReLU).
    p_bf16 = prepare_params(w1, b1, w2, b2)
    out_bf16 = jax.block_until_ready(net_forward(x, *p_bf16, block_b=16))
    assert out_bf16.shape == (B, O)
    assert jnp.allclose(out_bf16, ref, atol=5e-2, rtol=5e-2)

    # Exact f32 path.
    p_f32 = prepare_params(w1, b1, w2, b2, mxu_dtype=jnp.float32)
    out_f32 = jax.block_until_ready(net_forward(x, *p_f32, block_b=16))
    assert out_f32.shape == (B, O)
    assert jnp.allclose(out_f32, ref, atol=1e-5, rtol=1e-5)

    print("KERNEL_OK")
</pallas_src>

<mosaic_0001>
module attributes {stable_mosaic.version = 11 : i64} {
  func.func @_mlp_kernel(%arg0: i32, %arg1: memref<16x13xbf16, #tpu.memory_space<vmem>>, %arg2: memref<13x128xbf16, #tpu.memory_space<vmem>>, %arg3: memref<1x128xf32, #tpu.memory_space<vmem>>, %arg4: memref<128x1xbf16, #tpu.memory_space<vmem>>, %arg5: memref<1x1xf32, #tpu.memory_space<vmem>>, %arg6: memref<16x1xf32, #tpu.memory_space<vmem>>) attributes {dimension_semantics = [#tpu.dimension_semantics<parallel>], iteration_bounds = array<i64: 2>, scalar_prefetch = 0 : i64, scratch_operands = 0 : i64, tpu.core_type = #tpu.core_type<tc>, window_params = [{transform_indices = @transform_0, window_bounds = array<i64: 16, 13>}, {pipeline_mode = #tpu.pipeline_mode<synchronous>, transform_indices = @transform_1, window_bounds = array<i64: 13, 128>}, {pipeline_mode = #tpu.pipeline_mode<synchronous>, transform_indices = @transform_2, window_bounds = array<i64: 1, 128>}, {pipeline_mode = #tpu.pipeline_mode<synchronous>, transform_indices = @transform_3, window_bounds = array<i64: 128, 1>}, {pipeline_mode = #tpu.pipeline_mode<synchronous>, transform_indices = @transform_4, window_bounds = array<i64: 1, 1>}, {transform_indices = @transform_5, window_bounds = array<i64: 16, 1>}]} {
    %c0 = arith.constant 0 : index
    %c0_0 = arith.constant 0 : index
    %0 = vector.load %arg1[%c0, %c0_0] : memref<16x13xbf16, #tpu.memory_space<vmem>>, vector<16x13xbf16>
    %c0_1 = arith.constant 0 : index
    %c0_2 = arith.constant 0 : index
    %1 = vector.load %arg2[%c0_1, %c0_2] : memref<13x128xbf16, #tpu.memory_space<vmem>>, vector<13x128xbf16>
    %cst = arith.constant dense<0.000000e+00> : vector<16x128xf32>
    %2 = tpu.matmul %0, %1, %cst {dimension_numbers = #tpu.dot_dimension_numbers<[1], [0], [0], [1], [0, 0, 1, 1], [], []>} : vector<16x13xbf16>, vector<13x128xbf16>, vector<16x128xf32> -> vector<16x128xf32>
    %c0_3 = arith.constant 0 : index
    %c0_4 = arith.constant 0 : index
    %3 = vector.load %arg3[%c0_3, %c0_4] : memref<1x128xf32, #tpu.memory_space<vmem>>, vector<1x128xf32>
    %4 = vector.broadcast %3 : vector<1x128xf32> to vector<16x128xf32>
    %5 = arith.addf %2, %4 : vector<16x128xf32>
    %cst_5 = arith.constant 0.000000e+00 : f32
    %6 = vector.broadcast %cst_5 : f32 to vector<16x128xf32>
    %7 = arith.maximumf %5, %6 : vector<16x128xf32>
    %8 = arith.truncf %7 : vector<16x128xf32> to vector<16x128xbf16>
    %c0_6 = arith.constant 0 : index
    %c0_7 = arith.constant 0 : index
    %9 = vector.load %arg4[%c0_6, %c0_7] : memref<128x1xbf16, #tpu.memory_space<vmem>>, vector<128x1xbf16>
    %cst_8 = arith.constant dense<0.000000e+00> : vector<16x1xf32>
    %10 = tpu.matmul %8, %9, %cst_8 {dimension_numbers = #tpu.dot_dimension_numbers<[1], [0], [0], [1], [0, 0, 1, 1], [], []>} : vector<16x128xbf16>, vector<128x1xbf16>, vector<16x1xf32> -> vector<16x1xf32>
    %c0_9 = arith.constant 0 : index
    %c0_10 = arith.constant 0 : index
    %11 = vector.load %arg5[%c0_9, %c0_10] : memref<1x1xf32, #tpu.memory_space<vmem>>, vector<1x1xf32>
    %12 = vector.broadcast %11 : vector<1x1xf32> to vector<16x1xf32>
    %13 = arith.addf %10, %12 : vector<16x1xf32>
    %c0_11 = arith.constant 0 : index
    %c0_12 = arith.constant 0 : index
    %14 = vector.load %arg6[%c0_11, %c0_12] : memref<16x1xf32, #tpu.memory_space<vmem>>, vector<16x1xf32>
    tpu.vector_store %arg6[%c0_11, %c0_12], %13 {strides = array<i32>} : memref<16x1xf32, #tpu.memory_space<vmem>>, vector<16x1xf32>,
    return
  }
  func.func @transform_0(%arg0: i32) -> (i32, i32) {
    %c0_i32 = arith.constant 0 : i32
    %c0_i32_0 = arith.constant 0 : i32
    return %arg0, %c0_i32 : i32, i32
  }
  func.func @transform_1(%arg0: i32) -> (i32, i32) {
    %c0_i32 = arith.constant 0 : i32
    %c0_i32_0 = arith.constant 0 : i32
    %c0_i32_1 = arith.constant 0 : i32
    return %c0_i32, %c0_i32_0 : i32, i32
  }
  func.func @transform_2(%arg0: i32) -> (i32, i32) {
    %c0_i32 = arith.constant 0 : i32
    %c0_i32_0 = arith.constant 0 : i32
    %c0_i32_1 = arith.constant 0 : i32
    return %c0_i32, %c0_i32_0 : i32, i32
  }
  func.func @transform_3(%arg0: i32) -> (i32, i32) {
    %c0_i32 = arith.constant 0 : i32
    %c0_i32_0 = arith.constant 0 : i32
    %c0_i32_1 = arith.constant 0 : i32
    return %c0_i32, %c0_i32_0 : i32, i32
  }
  func.func @transform_4(%arg0: i32) -> (i32, i32) {
    %c0_i32 = arith.constant 0 : i32
    %c0_i32_0 = arith.constant 0 : i32
    %c0_i32_1 = arith.constant 0 : i32
    return %c0_i32, %c0_i32_0 : i32, i32
  }
  func.func @transform_5(%arg0: i32) -> (i32, i32) {
    %c0_i32 = arith.constant 0 : i32
    %c0_i32_0 = arith.constant 0 : i32
    return %arg0, %c0_i32 : i32, i32
  }
}

</mosaic_0001>

<llo_original>
// kernel: net_forward.1
$region0: #{net_forward.1}
  #allocation0 [shape = 'u32[]', space=smem, size = 0x4, offset = 0x4, fixed_abs, tag = 'smem constant byte address 0x4 - core index']
  #allocation1 [shape = 'u32[144,128]{1,0:T(1,128)}', space=vmem, size = 0x12000, scoped, tag = 'internal scratch']
  #allocation2 [shape = 'f32[1,1]{1,0:T(1,128)S(1)}', space=vmem, size = 0x200, scoped, tag = 'scoped memory for net_forward.1']
  %s0 = inlined_call_operand.vmem [shape: bf16[32,13], index: 0, kind: input, shape index: {}]
  %s1 = inlined_call_operand.vmem [shape: bf16[13,128], index: 1, kind: input, shape index: {}]
  %s2 = inlined_call_operand.vmem [shape: f32[1,128], index: 2, kind: input, shape index: {}]
  %s3 = inlined_call_operand.vmem [shape: bf16[128,1], index: 3, kind: input, shape index: {}]
  %s4 = inlined_call_operand.<no memory space> [shape: f32[1,1], index: 4, kind: input, shape index: {}]
  %s5 = inlined_call_operand.vmem [shape: f32[32,1], index: 5, kind: output, shape index: {}]
  %s6 = sld [smem:[#allocation0]]
  $region53: #{net_forward.1} parent=0
    _
  %s8 = ssub.s32 1, %s6
  %s9 = scalar_select 0, %s8, %s6
  %v10 = vstv %s4
  %11 = vst [vmem:[#allocation2] sm:$0x1] %v10
  loop: start=0, step=1, limit=4
  $region2: #{net_forward.1} parent=0 // loop_pre_header
    _
  $region3: #{net_forward.1} parent=0 // loop_header
    %s13 = sphi 0, %s17
    %p14 = scmp.ge.s32.totalorder %s13, 4
    %s23 = sphi 0, %s25
    %s26 = sphi 0, %s23
    %s27 = sphi 0, %s26
    %s43 = sphi 0, %s27
    %s47 = sphi 0, %s47
    %s49 = sphi 0, %s47
    %s50 = sphi 0, %s49
    %s64 = sphi 0, %s50
    %s68 = sphi 0, %s68
    %s70 = sphi 0, %s68
    %s71 = sphi 0, %s70
    %s85 = sphi 0, %s71
    %s89 = sphi 0, %s89
    %s91 = sphi 0, %s89
    %s92 = sphi 0, %s91
    %s106 = sphi 0, %s92
    %s110 = sphi 0, %s110
    %s112 = sphi 0, %s110
    %s113 = sphi 0, %s112
    %s127 = sphi 0, %s113
    %s133 = sphi 0, %s135
    %s136 = sphi 0, %s133
    %s137 = sphi 0, %s136
    %s153 = sphi 0, %s137
  $region4: #{net_forward.1} parent=0 // loop_header_branch
    %16 = sbr.rel (%p14) target = $region8
  $region5: #{net_forward.1} parent=0 // loop_body
    %s18 = ssub.s32 %s13, 1
    %s19 = ssub.s32 %s13, 2
    %s20 = sadd.s32 %s13, 1
    %s21 = ssub.s32 %s13, %s20
    %p22 = scmp.eq.s32.totalorder %s21, 0
    %s24 = sadd.s32 %s23, 1
    %s25 = scalar_select %p22, %s23, %s24
    %p28 = pneg %p22
    %p29 = scmp.eq.s32.totalorder %s13, 1
    %p30 = por %p28, %p29
    %p31 = scmp.ne.s32.totalorder %s23, %s26
    %p32 = scmp.eq.s32.totalorder %s13, 0
    %p33 = por %p31, %p32
    %p34 = scmp.ne.s32.totalorder %s23, %s26
    %p35 = scmp.eq.s32.totalorder %s18, 1
    %p36 = por %p34, %p35
    %p37 = scmp.ne.s32.totalorder %s26, %s27
    %p38 = scmp.eq.s32.totalorder %s18, 0
    %p39 = por %p37, %p38
    %p40 = scmp.ne.s32.totalorder %s26, %s27
    %p41 = scmp.eq.s32.totalorder %s19, 1
    %p42 = por %p40, %p41
    %p44 = scmp.ne.s32.totalorder %s27, %s43
    %p45 = scmp.eq.s32.totalorder %s19, 0
    %p46 = por %p44, %p45
    %s48 = sadd.s32 %s47, 1
    %p51 = scmp.eq.s32.totalorder %s13, 1
    %p52 = scmp.ne.s32.totalorder %s47, %s49
    %p53 = scmp.eq.s32.totalorder %s13, 0
    %p54 = por %p52, %p53
    %p55 = scmp.ne.s32.totalorder %s47, %s49
    %p56 = scmp.eq.s32.totalorder %s18, 1
    %p57 = por %p55, %p56
    %p58 = scmp.ne.s32.totalorder %s49, %s50
    %p59 = scmp.eq.s32.totalorder %s18, 0
    %p60 = por %p58, %p59
    %p61 = scmp.ne.s32.totalorder %s49, %s50
    %p62 = scmp.eq.s32.totalorder %s19, 1
    %p63 = por %p61, %p62
    %p65 = scmp.ne.s32.totalorder %s50, %s64
    %p66 = scmp.eq.s32.totalorder %s19, 0
    %p67 = por %p65, %p66
    %s69 = sadd.s32 %s68, 1
    %p72 = scmp.eq.s32.totalorder %s13, 1
    %p73 = scmp.ne.s32.totalorder %s68, %s70
    %p74 = scmp.eq.s32.totalorder %s13, 0
    %p75 = por %p73, %p74
    %p76 = scmp.ne.s32.totalorder %s68, %s70
    %p77 = scmp.eq.s32.totalorder %s18, 1
    %p78 = por %p76, %p77
    %p79 = scmp.ne.s32.totalorder %s70, %s71
    %p80 = scmp.eq.s32.totalorder %s18, 0
    %p81 = por %p79, %p80
    %p82 = scmp.ne.s32.totalorder %s70, %s71
    %p83 = scmp.eq.s32.totalorder %s19, 1
    %p84 = por %p82, %p83
    %p86 = scmp.ne.s32.totalorder %s71, %s85
    %p87 = scmp.eq.s32.totalorder %s19, 0
    %p88 = por %p86, %p87
    %s90 = sadd.s32 %s89, 1
    %p93 = scmp.eq.s32.totalorder %s13, 1
    %p94 = scmp.ne.s32.totalorder %s89, %s91
    %p95 = scmp.eq.s32.totalorder %s13, 0
    %p96 = por %p94, %p95
    %p97 = scmp.ne.s32.totalorder %s89, %s91
    %p98 = scmp.eq.s32.totalorder %s18, 1
    %p99 = por %p97, %p98
    %p100 = scmp.ne.s32.totalorder %s91, %s92
    %p101 = scmp.eq.s32.totalorder %s18, 0
    %p102 = por %p100, %p101
    %p103 = scmp.ne.s32.totalorder %s91, %s92
    %p104 = scmp.eq.s32.totalorder %s19, 1
    %p105 = por %p103, %p104
    %p107 = scmp.ne.s32.totalorder %s92, %s106
    %p108 = scmp.eq.s32.totalorder %s19, 0
    %p109 = por %p107, %p108
    %s111 = sadd.s32 %s110, 1
    %p114 = scmp.eq.s32.totalorder %s13, 1
    %p115 = scmp.ne.s32.totalorder %s110, %s112
    %p116 = scmp.eq.s32.totalorder %s13, 0
    %p117 = por %p115, %p116
    %p118 = scmp.ne.s32.totalorder %s110, %s112
    %p119 = scmp.eq.s32.totalorder %s18, 1
    %p120 = por %p118, %p119
    %p121 = scmp.ne.s32.totalorder %s112, %s113
    %p122 = scmp.eq.s32.totalorder %s18, 0
    %p123 = por %p121, %p122
    %p124 = scmp.ne.s32.totalorder %s112, %s113
    %p125 = scmp.eq.s32.totalorder %s19, 1
    %p126 = por %p124, %p125
    %p128 = scmp.ne.s32.totalorder %s113, %s127
    %p129 = scmp.eq.s32.totalorder %s19, 0
    %p130 = por %p128, %p129
    %s131 = ssub.s32 %s13, %s20
    %p132 = scmp.eq.s32.totalorder %s131, 0
    %s134 = sadd.s32 %s133, 1
    %s135 = scalar_select %p132, %s133, %s134
    %p138 = pneg %p132
    %p139 = scmp.eq.s32.totalorder %s13, 1
    %p140 = por %p138, %p139
    %p141 = scmp.ne.s32.totalorder %s133, %s136
    %p142 = scmp.eq.s32.totalorder %s13, 0
    %p143 = por %p141, %p142
    %p144 = scmp.ne.s32.totalorder %s133, %s136
    %p145 = scmp.eq.s32.totalorder %s18, 1
    %p146 = por %p144, %p145
    %p147 = scmp.ne.s32.totalorder %s136, %s137
    %p148 = scmp.eq.s32.totalorder %s18, 0
    %p149 = por %p147, %p148
    %p150 = scmp.ne.s32.totalorder %s136, %s137
    %p151 = scmp.eq.s32.totalorder %s19, 1
    %p152 = por %p150, %p151
    %p154 = scmp.ne.s32.totalorder %s137, %s153
    %p155 = scmp.eq.s32.totalorder %s19, 0
    %p156 = por %p154, %p155
    %p157 = scmp.le.s32.totalorder 1, %s13
    %p158 = scmp.lt.s32.totalorder %s13, 3
    %p159 = pnand %p157, %p158
    %p160 = pneg %p159
    // Predicated region
    $region9: #{net_forward.1} parent=5 // pred_check
      _
    $region10: #{net_forward.1} parent=5 // pred_check_branch
      %162 = sbr.rel (%p159) target = $region12
    $region11: #{net_forward.1} parent=5 // pred_region
      %s163 = ssub.s32 %s13, 1
      // Predicated region
      $region13: #{net_forward.1} parent=11 // pred_check
        %p164 = pneg %p60
      $region14: #{net_forward.1} parent=11 // pred_check_branch
        %166 = sbr.rel (%p164) target = $region16
      $region15: #{net_forward.1} parent=11 // pred_region
        _
      $region16: #{net_forward.1} parent=11 // pred_fallthru
        _
      // Predicated region
      $region17: #{net_forward.1} parent=11 // pred_check
        %p167 = pneg %p81
      $region18: #{net_forward.1} parent=11 // pred_check_branch
        %169 = sbr.rel (%p167) target = $region20
      $region19: #{net_forward.1} parent=11 // pred_region
        _
      $region20: #{net_forward.1} parent=11 // pred_fallthru
        _
      // Predicated region
      $region21: #{net_forward.1} parent=11 // pred_check
        %p170 = pneg %p102
      $region22: #{net_forward.1} parent=11 // pred_check_branch
        %172 = sbr.rel (%p170) target = $region24
      $region23: #{net_forward.1} parent=11 // pred_region
        _
      $region24: #{net_forward.1} parent=11 // pred_fallthru
        _
      // Predicated region
      $region25: #{net_forward.1} parent=11 // pred_check
        %p173 = pneg %p123
      $region26: #{net_forward.1} parent=11 // pred_check_branch
        %175 = sbr.rel (%p173) target = $region28
      $region27: #{net_forward.1} parent=11 // pred_region
        _
      $region28: #{net_forward.1} parent=11 // pred_fallthru
        _
    $region12: #{net_forward.1} parent=5 // pred_fallthru
      _
    %p176 = scmp.lt.s32.totalorder %s13, 2
    // Predicated region
    $region29: #{net_forward.1} parent=5 // pred_check
      %p177 = pneg %p176
    $region30: #{net_forward.1} parent=5 // pred_check_branch
      %179 = sbr.rel (%p177) target = $region32
    $region31: #{net_forward.1} parent=5 // pred_region
      // Predicated region
      $region33: #{net_forward.1} parent=31 // pred_check
        %p180 = pneg %p33
      $region34: #{net_forward.1} parent=31 // pred_check_branch
        %182 = sbr.rel (%p180) target = $region36
      $region35: #{net_forward.1} parent=31 // pred_region
        %s183 = smul.u32 2, %s13
        %p184 = scmp.lt.s32.totalorder %s183, 3
        %s185 = scalar_select %p184, %s183, 3
        %s186 = smul.addr %s185, 4
        %s187 = scalar_lea.vmem %s0, %s186
        %s188 = smul.u32 2, %s13
      $region36: #{net_forward.1} parent=31 // pred_fallthru
        _
    $region32: #{net_forward.1} parent=5 // pred_fallthru
      _
    %p189 = scmp.le.s32.totalorder 1, %s13
    %p190 = scmp.lt.s32.totalorder %s13, 3
    %p191 = pnand %p189, %p190
    %p192 = pneg %p191
    // Predicated region
    $region37: #{net_forward.1} parent=5 // pred_check
      _
    $region38: #{net_forward.1} parent=5 // pred_check_branch
      %194 = sbr.rel (%p191) target = $region40
    $region39: #{net_forward.1} parent=5 // pred_region
      %s195 = ssub.s32 %s13, 1
      %s196 = smul.u32 2, %s18
      %p197 = scmp.lt.s32.totalorder %s196, 3
      %s198 = scalar_select %p197, %s196, 3
      %s199 = smul.addr %s198, 4
      %s200 = scalar_lea.vmem %s0, %s199
      %p201 = pneg %p39
      %p202 = pneg %p36
      %p203 = pneg %p60
      %p204 = pneg %p57
      %p205 = pneg %p81
      %p206 = pneg %p78
      %p207 = pneg %p102
      %p208 = pneg %p99
      %p209 = pneg %p123
      %p210 = pneg %p120
      %p211 = pneg %p149
      %p212 = pneg %p146
      %s213 = smul.u32 2, %s18
      %p214 = scmp.lt.s32.totalorder %s213, 3
      %s215 = scalar_select %p214, %s213, 3
      %s216 = smul.addr %s215, 8
      %s217 = scalar_lea.vmem %s5, %s216
      %s218 = smul.u32 2, %s18
      %p219 = scmp.lt.s32.totalorder %s218, 3
      %s220 = scalar_select %p219, %s218, 3
      %s221 = smul.addr %s220, 4
      %s222 = scalar_lea.vmem %s0, %s221
      %s223 = smul.u32 2, %s18
      %s224 = smul.u32 2, %s18
      %p225 = scmp.lt.s32.totalorder %s224, 3
      %s226 = scalar_select %p225, %s224, 3
      %s227 = smul.addr %s226, 8
      %s228 = scalar_lea.vmem %s5, %s227
      %s229 = smul.u32 2, %s18
      %v231 = vld [vmem:[%s222] sm:$0xf]
      %v232 = vld [vmem:[%s222 + $0x4] sm:$0xf]
      %v233 = vld [vmem:[%s1] sm:$0xf]
      %v234 = vld [vmem:[%s1 + $0x4] sm:$0x7]
      %v235 = vld [vmem:[%s2] sm:$0x1]
      %v237 = vlaneseq
      %v238 = vshrl.u32 %v237, 7
      %v239 = vsub.s32 0, %v238
      %v240 = vrot.slane %v235, %v239
      %v244 = vunpack.c.l.b16 %v231
      %v245 = vunpack.c.l.b16 %v232
      %v246 = vpack.c.b16 %v245, %v244
      %v249 = vunpack.c.l.b16 %v233
      %v250 = vunpack.c.l.b16 %v234
      %v251 = vpack.c.b16 %v250, %v249
      %vm252 = vcmask 105472
      %v254 = vsel %vm252, %v246, 0
      %vm256 = vcmask 1045504
      %vm257 = vcmask 1046528
      %v258 = vsel %vm256, 4294967295, 65535
      %v259 = vsel %vm257, %v258, 0
      %v261 = vand.u32 %v251, %v259
      %263 = vmatprep.subr.bf16.mxu0 0
      %264 = vmatpush1.bf16.msra.mxu0 0
      %265 = vmatprep.subr.bf16.mxu0 0
      %266 = vmatpush1.bf16.msra.mxu0 0
      %267 = vmatprep.subr.bf16.mxu0 0
      %268 = vmatpush1.bf16.msra.mxu0 0
      %269 = vmatprep.subr.bf16.mxu0 0
      %270 = vmatpush1.bf16.msra.mxu0 0
      %271 = vmatprep.subr.bf16.mxu0 0
      %272 = vmatpush1.bf16.msra.mxu0 0
      %273 = vmatprep.subr.bf16.mxu0 0
      %274 = vmatpush1.bf16.msra.mxu0 0
      %275 = vmatprep.subr.bf16.mxu0 0
      %276 = vmatpush1.bf16.msra.mxu0 0
      %277 = vmatprep.subr.bf16.mxu0 0
      %278 = vmatpush1.bf16.msra.mxu0 %v261
      %279 = vmatprep.subr.bf16.mxu0 0
      %280 = vmatpush2.bf16.msra.mxu0 0
      %281 = vmatprep.subr.bf16.mxu0 0
      %282 = vmatpush2.bf16.msra.mxu0 0
      %283 = vmatprep.subr.bf16.mxu0 0
      %284 = vmatpush2.bf16.msra.mxu0 0
      %285 = vmatprep.subr.bf16.mxu0 0
      %286 = vmatpush2.bf16.msra.mxu0 0
      %287 = vmatprep.subr.bf16.mxu0 0
      %288 = vmatpush2.bf16.msra.mxu0 0
      %289 = vmatprep.subr.bf16.mxu0 0
      %290 = vmatpush2.bf16.msra.mxu0 0
      %291 = vmatprep.subr.bf16.mxu0 0
      %292 = vmatpush2.bf16.msra.mxu0 0
      %293 = vmatprep.subr.bf16.mxu0 0
      %294 = vmatpush2.bf16.msra.mxu0 0
      %295 = vmatprep.mubr.bf16.mxu0 0
      %296 = vmatmul.mubr.bf16.gmra.mxu0 %v254
      %v297 = vpop.f32.mrf.mxu0
      %v298 = vadd.f32 %v240, %v297
      %v299 = vpop.f32.mrf.mxu0
      %v300 = vpop.f32.mrf.mxu0
      %v301 = vadd.f32 %v240, %v300
      %v302 = vpop.f32.mrf.mxu0
      %303 = vdwg.mxu0
      %v304 = vmax.f32 %v298, 0.0
      %v305 = vmax.f32 %v301, 0.0
      %v306 = vpack.c.bf16 %v305, %v304
      %v307 = vld [vmem:[%s3] sm:$0xf]
      %v308 = vld [vmem:[%s3 + $0x4] sm:$0xf]
      %v309 = vld [vmem:[%s3 + $0x8] sm:$0xf]
      %v310 = vld [vmem:[%s3 + $0xc] sm:$0xf]
      %v311 = vld [vmem:[%s3 + $0x10] sm:$0xf]
      %v312 = vld [vmem:[%s3 + $0x14] sm:$0xf]
      %v313 = vld [vmem:[%s3 + $0x18] sm:$0xf]
      %v314 = vld [vmem:[%s3 + $0x1c] sm:$0xf]
      %v315 = vld [vmem:[%s3 + $0x20] sm:$0xf]
      %v316 = vld [vmem:[%s3 + $0x24] sm:$0xf]
      %v317 = vld [vmem:[%s3 + $0x28] sm:$0xf]
      %v318 = vld [vmem:[%s3 + $0x2c] sm:$0xf]
      %v319 = vld [vmem:[%s3 + $0x30] sm:$0xf]
      %v320 = vld [vmem:[%s3 + $0x34] sm:$0xf]
      %v321 = vld [vmem:[%s3 + $0x38] sm:$0xf]
      %v322 = vld [vmem:[%s3 + $0x3c] sm:$0xf]
      %v323 = vld [vmem:[#allocation2] sm:$0x1]
      %v325 = vlaneseq
      %v326 = vshrl.u32 %v325, 7
      %v327 = vsub.s32 0, %v326
      %v328 = vrot.slane %v323, %v327
      %v346 = vunpack.c.l.b16 %v307
      %v347 = vunpack.c.l.b16 %v308
      %v348 = vunpack.c.l.b16 %v309
      %v349 = vunpack.c.l.b16 %v310
      %v350 = vunpack.c.l.b16 %v311
      %v351 = vunpack.c.l.b16 %v312
      %v352 = vunpack.c.l.b16 %v313
      %v353 = vunpack.c.l.b16 %v314
      %v354 = vunpack.c.l.b16 %v315
      %v355 = vunpack.c.l.b16 %v316
      %v356 = vunpack.c.l.b16 %v317
      %v357 = vunpack.c.l.b16 %v318
      %v358 = vunpack.c.l.b16 %v319
      %v359 = vunpack.c.l.b16 %v320
      %v360 = vunpack.c.l.b16 %v321
      %v361 = vunpack.c.l.b16 %v322
      %v362 = vpack.c.b16 %v347, %v346
      %v363 = vpack.c.b16 %v349, %v348
      %v364 = vpack.c.b16 %v351, %v350
      %v365 = vpack.c.b16 %v353, %v352
      %v366 = vpack.c.b16 %v355, %v354
      %v367 = vpack.c.b16 %v357, %v356
      %v368 = vpack.c.b16 %v359, %v358
      %v369 = vpack.c.b16 %v361, %v360
      %378 = vmatprep.subr.bf16.mxu0 0
      %379 = vmatpush1.bf16.msra.mxu0 %v369
      %380 = vmatprep.subr.bf16.mxu0 0
      %381 = vmatpush1.bf16.msra.mxu0 %v368
      %382 = vmatprep.subr.bf16.mxu0 0
      %383 = vmatpush1.bf16.msra.mxu0 %v367
      %384 = vmatprep.subr.bf16.mxu0 0
      %385 = vmatpush1.bf16.msra.mxu0 %v366
      %386 = vmatprep.subr.bf16.mxu0 0
      %387 = vmatpush1.bf16.msra.mxu0 %v365
      %388 = vmatprep.subr.bf16.mxu0 0
      %389 = vmatpush1.bf16.msra.mxu0 %v364
      %390 = vmatprep.subr.bf16.mxu0 0
      %391 = vmatpush1.bf16.msra.mxu0 %v363
      %392 = vmatprep.subr.bf16.mxu0 0
      %393 = vmatpush1.bf16.msra.mxu0 %v362
      %394 = vmatprep.subr.bf16.mxu0 0
      %395 = vmatpush2.bf16.msra.mxu0 0
      %396 = vmatprep.subr.bf16.mxu0 0
      %397 = vmatpush2.bf16.msra.mxu0 0
      %398 = vmatprep.subr.bf16.mxu0 0
      %399 = vmatpush2.bf16.msra.mxu0 0
      %400 = vmatprep.subr.bf16.mxu0 0
      %401 = vmatpush2.bf16.msra.mxu0 0
      %402 = vmatprep.subr.bf16.mxu0 0
      %403 = vmatpush2.bf16.msra.mxu0 0
      %404 = vmatprep.subr.bf16.mxu0 0
      %405 = vmatpush2.bf16.msra.mxu0 0
      %406 = vmatprep.subr.bf16.mxu0 0
      %407 = vmatpush2.bf16.msra.mxu0 0
      %408 = vmatprep.subr.bf16.mxu0 0
      %409 = vmatpush2.bf16.msra.mxu0 0
      %410 = vmatprep.mubr.bf16.mxu0 0
      %411 = vmatmul.mubr.bf16.gmra.mxu0 %v306
      %v412 = vpop.f32.mrf.mxu0
      %v413 = vadd.f32 %v328, %v412
      %v414 = vpop.f32.mrf.mxu0
      %v415 = vpop.f32.mrf.mxu0
      %v416 = vadd.f32 %v328, %v415
      %v417 = vpop.f32.mrf.mxu0
      %418 = vdwg.mxu0
      %vm419 = vcmask 7168
      %420 = vst.msk [vmem:[%s228] sm:$0xff] %vm419, %v413
      %421 = vst.msk [vmem:[%s228 + $0x8] sm:$0xff] %vm419, %v416
      %s422 = smul.u32 2, %s18
      %p423 = scmp.lt.s32.totalorder %s422, 3
      %s424 = scalar_select %p423, %s422, 3
      %s425 = smul.addr %s424, 8
      %s426 = scalar_lea.vmem %s5, %s425
      // Predicated region
      $region41: #{net_forward.1} parent=39 // pred_check
        %p427 = pneg %p146
      $region42: #{net_forward.1} parent=39 // pred_check_branch
        %429 = sbr.rel (%p427) target = $region44
      $region43: #{net_forward.1} parent=39 // pred_region
        %s430 = smul.u32 2, %s18
      $region44: #{net_forward.1} parent=39 // pred_fallthru
        _
    $region40: #{net_forward.1} parent=5 // pred_fallthru
      _
    %p431 = scmp.le.s32.totalorder 2, %s13
    // Predicated region
    $region45: #{net_forward.1} parent=5 // pred_check
      %p432 = pneg %p431
    $region46: #{net_forward.1} parent=5 // pred_check_branch
      %434 = sbr.rel (%p432) target = $region48
    $region47: #{net_forward.1} parent=5 // pred_region
      %s435 = ssub.s32 %s13, 2
      // Predicated region
      $region49: #{net_forward.1} parent=47 // pred_check
        %p436 = pneg %p152
      $region50: #{net_forward.1} parent=47 // pred_check_branch
        %438 = sbr.rel (%p436) target = $region52
      $region51: #{net_forward.1} parent=47 // pred_region
        %s439 = smul.u32 2, %s19
        %p440 = scmp.lt.s32.totalorder %s439, 3
        %s441 = scalar_select %p440, %s439, 3
        %s442 = smul.addr %s441, 8
        %s443 = scalar_lea.vmem %s5, %s442
      $region52: #{net_forward.1} parent=47 // pred_fallthru
        _
    $region48: #{net_forward.1} parent=5 // pred_fallthru
      _
  $region6: #{net_forward.1} parent=0 // loop_footer
    %s17 = sadd.s32 1, %s13
  $region7: #{net_forward.1} parent=0 // loop_footer_branch
    %12 = sbr.rel target = $region3
  $region8: #{net_forward.1} parent=0 // loop_exit
    _

</llo_original>
